<compile_context>
chip_gen: v5e
topology: v5e:2x2
jax: 0.10.0
libtpu: 0.0.40
codegen_flags: <defaults>
</compile_context>

<pallas_src>
import jax
import jax.numpy as jnp
from jax import lax
from jax.experimental import pallas as pl
from jax.experimental.pallas import tpu as pltpu


def _round_up(x, m):
    return ((x + m - 1) // m) * m


def _ipd_kernel(zr_ref, zc_ref, o_ref):
    # zr_ref: (1, TM, D) row panel, zc_ref: (1, TN, D) column panel.
    s = lax.dot_general(
        zr_ref[0], zc_ref[0],
        dimension_numbers=(((1,), (1,)), ((), ())),   # contract D; RHS transposed inside the MXU
        preferred_element_type=jnp.float32,
    )
    # sigmoid(x) == 0.5 * tanh(0.5 * x) + 0.5  -> one EUP push instead of exp + recip.
    o_ref[0] = (0.5 * jnp.tanh(0.5 * s) + 0.5).astype(o_ref.dtype)


def _ipd_kernel_dtiled(zr_ref, zc_ref, o_ref, acc_ref):
    d = pl.program_id(3)

    @pl.when(d == 0)
    def _():
        acc_ref[...] = jnp.zeros_like(acc_ref)

    acc_ref[...] += lax.dot_general(
        zr_ref[0], zc_ref[0],
        dimension_numbers=(((1,), (1,)), ((), ())),
        preferred_element_type=jnp.float32,
    )

    @pl.when(d == pl.num_programs(3) - 1)
    def _():
        o_ref[0] = (0.5 * jnp.tanh(0.5 * acc_ref[...]) + 0.5).astype(o_ref.dtype)


def inner_product_decoder(z, dropout=0.0, training=False, *,
                          block_m=512, block_n=512, block_d=None,
                          out_layout="KNN",
                          out_dtype=jnp.bfloat16,
                          panel_dtype=jnp.bfloat16):
    """z: [N, K, D] -> [K, N, N] ("KNN", lane-dense, default) or [N, N, K] ("NNK").

    Matches the PyTorch InnerProductDecoder in eval mode (dropout = identity).
    """
    if training and dropout > 0.0:
        # TODO(synk): training-mode dropout (stochastic masking of z[:, k, :]
        # via pltpu.prng_seed / pltpu.prng_random_bits) is not implemented.
        raise NotImplementedError(
            "inner_product_decoder: training-mode dropout not implemented")
    if out_layout not in ("KNN", "NNK"):
        raise ValueError("out_layout must be 'KNN' or 'NNK'")

    N, K, D = z.shape
    out_dtype = z.dtype if out_dtype is None else out_dtype

    # --- tile selection ------------------------------------------------------
    # Lane-dense (multiple-of-128) output tiles; Pallas masks partial edge
    # blocks, so N is never padded and the result is never sliced.
    if N < 128:
        tm = tn = N                        # full-extent blocks: always legal
    else:
        tn = min(_round_up(block_n, 128), (N // 128) * 128)
        tm = min(_round_up(block_m, 8), (N // 8) * 8)

    # Megacore balance (v7x: 2 TensorCores): ensure >= 2 parallel grid steps
    # when K == 1 and a single tile would cover all of N.
    if K * pl.cdiv(N, tm) * pl.cdiv(N, tn) == 1 and N >= 16:
        tm = _round_up(-(-N // 2), 8)

    # --- one-time relayout / cast --------------------------------------------
    # [N, K, D] -> [K, N, D]: D stays the full last dim of every panel.
    zt = jnp.transpose(z, (1, 0, 2))
    if panel_dtype is not None and zt.dtype != panel_dtype:
        # bf16 panels: single-pass MXU matmul + half the column re-stream DMA.
        zt = zt.astype(panel_dtype)
    in_isz = jnp.dtype(zt.dtype).itemsize

    # --- contraction (D) tiling ------------------------------------------------
    if block_d is None:
        # Only tile D when full-D double-buffered panels would crowd VMEM.
        td = D if 2 * (tm + tn) * D * in_isz <= (16 << 20) else 512
    else:
        td = _round_up(block_d, 128)
    if td >= D:
        td, d_tiled, d_eff = D, False, D
    else:
        d_tiled = True
        d_eff = _round_up(D, td)
        if d_eff != D:
            # Zero-padding the contraction dim is exact for x @ x.T (no
            # garbage ever enters the accumulator).
            zt = jnp.pad(zt, ((0, 0), (0, 0), (0, d_eff - D)))

    # --- grid / specs ----------------------------------------------------------
    if d_tiled:
        grid = (K, pl.cdiv(N, tm), pl.cdiv(N, tn), d_eff // td)
        in_specs = [
            pl.BlockSpec((1, tm, td), lambda k, i, j, d: (k, i, d)),
            pl.BlockSpec((1, tn, td), lambda k, i, j, d: (k, j, d)),
        ]
        out_specs = pl.BlockSpec((1, tm, tn), lambda k, i, j, d: (k, i, j))
        scratch_shapes = [pltpu.VMEM((tm, tn), jnp.float32)]
        dim_sem = ("parallel", "parallel", "parallel", "arbitrary")
        kernel = _ipd_kernel_dtiled
    else:
        grid = (K, pl.cdiv(N, tm), pl.cdiv(N, tn))
        in_specs = [
            pl.BlockSpec((1, tm, D), lambda k, i, j: (k, i, 0)),  # rows: resident over j
            pl.BlockSpec((1, tn, D), lambda k, i, j: (k, j, 0)),  # cols: re-streamed
        ]
        out_specs = pl.BlockSpec((1, tm, tn), lambda k, i, j: (k, i, j))
        scratch_shapes = []
        dim_sem = ("parallel", "parallel", "parallel")
        kernel = _ipd_kernel

    out_isz = jnp.dtype(out_dtype).itemsize
    vmem_est = (2 * tm * tn * out_isz            # double-buffered output tile
                + 2 * tm * td * in_isz           # double-buffered row panel
                + 2 * tn * td * in_isz           # double-buffered column panel
                + (tm * tn * 4 if d_tiled else 0))
    vmem_limit = int(min(max(2 * vmem_est + (4 << 20), 32 << 20), 64 << 20))

    out_knn = pl.pallas_call(
        kernel,
        out_shape=jax.ShapeDtypeStruct((K, N, N), out_dtype),
        grid_spec=pltpu.PrefetchScalarGridSpec(
            num_scalar_prefetch=0,
            grid=grid,
            in_specs=in_specs,
            out_specs=out_specs,
            scratch_shapes=scratch_shapes,
        ),
        compiler_params=pltpu.CompilerParams(
            dimension_semantics=dim_sem,
            vmem_limit_bytes=vmem_limit,
        ),
    )(zt, zt)

    if out_layout == "KNN":
        return out_knn
    # PyTorch [N, N, K] convention: extra strided relayout (~2*K*N^2 bytes of
    # HBM traffic) -- prefer "KNN" in performance-sensitive pipelines.
    return jnp.transpose(out_knn, (1, 2, 0))


if __name__ == "__main__":
    def reference_nnk(z):
        K = z.shape[1]
        return jnp.stack(
            [jax.nn.sigmoid(z[:, i, :] @ z[:, i, :].T) for i in range(K)],
            axis=2)

    key = jax.random.PRNGKey(0)
    k1, k2, k3 = jax.random.split(key, 3)

    # Case 1: strict f32 path, PyTorch [N, N, K] layout, full-extent blocks.
    N, K, D = 16, 3, 32
    z = jax.random.normal(k1, (N, K, D), dtype=jnp.float32)
    out = jax.block_until_ready(inner_product_decoder(
        z, dropout=0.1, training=False, out_layout="NNK",
        out_dtype=jnp.float32, panel_dtype=jnp.float32))
    assert out.shape == (N, N, K)
    assert jnp.allclose(out, reference_nnk(z), atol=1e-5, rtol=1e-5)

    # Case 2: default perf path (bf16 panels + bf16 output, lane-dense KNN),
    # N not a multiple of the tile -> masked partial edge blocks, no pad/slice.
    N2, K2, D2 = 160, 2, 64
    z2 = jax.random.normal(k2, (N2, K2, D2), dtype=jnp.float32)
    out2 = jax.block_until_ready(
        inner_product_decoder(z2, block_m=512, block_n=128))
    assert out2.shape == (K2, N2, N2)
    zb = z2.astype(jnp.bfloat16)
    ref2 = jnp.stack(
        [jax.nn.sigmoid(jnp.dot(zb[:, i, :], zb[:, i, :].T,
                                preferred_element_type=jnp.float32))
         for i in range(K2)], axis=0)
    assert jnp.allclose(out2.astype(jnp.float32), ref2, atol=2e-2)
    ref2_f32 = jnp.transpose(reference_nnk(z2), (2, 0, 1))
    assert jnp.allclose(out2.astype(jnp.float32), ref2_f32, atol=6e-2)

    # Case 3: D-tiled reduction path (f32 accumulator scratch) + megacore
    # split heuristic (K = 1, single (i, j) tile).
    N3, K3, D3 = 128, 1, 256
    z3 = jax.random.normal(k3, (N3, K3, D3), dtype=jnp.float32)
    out3 = jax.block_until_ready(inner_product_decoder(
        z3, block_d=128, out_dtype=jnp.float32, panel_dtype=jnp.float32))
    ref3 = jnp.transpose(reference_nnk(z3), (2, 0, 1))
    assert out3.shape == (K3, N3, N3)
    assert jnp.allclose(out3, ref3, atol=1e-4, rtol=1e-4)

    print("KERNEL_OK")
</pallas_src>

<mosaic_0001>
module attributes {stable_mosaic.version = 11 : i64} {
  func.func @_ipd_kernel(%arg0: i32, %arg1: i32, %arg2: i32, %arg3: memref<1x16x32xf32, #tpu.memory_space<vmem>>, %arg4: memref<1x16x32xf32, #tpu.memory_space<vmem>>, %arg5: memref<1x16x16xf32, #tpu.memory_space<vmem>>) attributes {dimension_semantics = [#tpu.dimension_semantics<parallel>, #tpu.dimension_semantics<parallel>, #tpu.dimension_semantics<parallel>], iteration_bounds = array<i64: 3, 1, 1>, scalar_prefetch = 0 : i64, scratch_operands = 0 : i64, tpu.core_type = #tpu.core_type<tc>, window_params = [{transform_indices = @transform_0, window_bounds = array<i64: 1, 16, 32>}, {transform_indices = @transform_1, window_bounds = array<i64: 1, 16, 32>}, {transform_indices = @transform_2, window_bounds = array<i64: 1, 16, 16>}]} {
    %c0 = arith.constant 0 : index
    %c0_0 = arith.constant 0 : index
    %c0_1 = arith.constant 0 : index
    %0 = vector.load %arg3[%c0, %c0_0, %c0_1] : memref<1x16x32xf32, #tpu.memory_space<vmem>>, vector<1x16x32xf32>
    %1 = vector.shape_cast %0 : vector<1x16x32xf32> to vector<16x32xf32>
    %c0_2 = arith.constant 0 : index
    %c0_3 = arith.constant 0 : index
    %c0_4 = arith.constant 0 : index
    %2 = vector.load %arg4[%c0_2, %c0_3, %c0_4] : memref<1x16x32xf32, #tpu.memory_space<vmem>>, vector<1x16x32xf32>
    %3 = vector.shape_cast %2 : vector<1x16x32xf32> to vector<16x32xf32>
    %cst = arith.constant dense<0.000000e+00> : vector<16x16xf32>
    %4 = tpu.matmul %1, %3, %cst {dimension_numbers = #tpu.dot_dimension_numbers<[1], [1], [0], [0], [0, 0, 1, 0], [], []>} : vector<16x32xf32>, vector<16x32xf32>, vector<16x16xf32> -> vector<16x16xf32>
    %cst_5 = arith.constant 5.000000e-01 : f32
    %5 = vector.broadcast %cst_5 : f32 to vector<16x16xf32>
    %6 = arith.mulf %5, %4 : vector<16x16xf32>
    %7 = math.tanh %6 : vector<16x16xf32>
    %cst_6 = arith.constant 5.000000e-01 : f32
    %8 = vector.broadcast %cst_6 : f32 to vector<16x16xf32>
    %9 = arith.mulf %8, %7 : vector<16x16xf32>
    %cst_7 = arith.constant 5.000000e-01 : f32
    %10 = vector.broadcast %cst_7 : f32 to vector<16x16xf32>
    %11 = arith.addf %9, %10 : vector<16x16xf32>
    %c0_8 = arith.constant 0 : index
    %c0_9 = arith.constant 0 : index
    %c0_10 = arith.constant 0 : index
    %12 = vector.load %arg5[%c0_8, %c0_9, %c0_10] : memref<1x16x16xf32, #tpu.memory_space<vmem>>, vector<1x16x16xf32>
    %13 = vector.shape_cast %12 : vector<1x16x16xf32> to vector<16x16xf32>
    %14 = vector.shape_cast %11 : vector<16x16xf32> to vector<1x16x16xf32>
    tpu.vector_store %arg5[%c0_8, %c0_9, %c0_10], %14 {strides = array<i32>} : memref<1x16x16xf32, #tpu.memory_space<vmem>>, vector<1x16x16xf32>,
    return
  }
  func.func @transform_0(%arg0: i32, %arg1: i32, %arg2: i32) -> (i32, i32, i32) {
    %c0_i32 = arith.constant 0 : i32
    %c0_i32_0 = arith.constant 0 : i32
    return %arg0, %arg1, %c0_i32 : i32, i32, i32
  }
  func.func @transform_1(%arg0: i32, %arg1: i32, %arg2: i32) -> (i32, i32, i32) {
    %c0_i32 = arith.constant 0 : i32
    %c0_i32_0 = arith.constant 0 : i32
    return %arg0, %arg2, %c0_i32 : i32, i32, i32
  }
  func.func @transform_2(%arg0: i32, %arg1: i32, %arg2: i32) -> (i32, i32, i32) {
    %c0_i32 = arith.constant 0 : i32
    return %arg0, %arg1, %arg2 : i32, i32, i32
  }
}

</mosaic_0001>

<llo_original>
// kernel: tpu_custom_call.1
$region0: #{tpu_custom_call.1}
  #allocation0 [shape = 'u32[]', space=smem, size = 0x4, offset = 0x4, fixed_abs, tag = 'smem constant byte address 0x4 - core index']
  #allocation1 [shape = 'u32[72,128]{1,0:T(1,128)}', space=vmem, size = 0x9000, scoped, tag = 'internal scratch']
  %s0 = inlined_call_operand.hbm [shape: f32[3,16,32], index: 0, kind: input, shape index: {}]
  %s1 = inlined_call_operand.hbm [shape: f32[3,16,32], index: 1, kind: input, shape index: {}]
  %s2 = inlined_call_operand.hbm [shape: f32[3,16,16], index: 2, kind: output, shape index: {}]
  %s3 = sld [smem:[#allocation0]]
  $region49: #{tpu_custom_call.1} parent=0
    _
  %s5 = ssub.s32 1, %s3
  %s6 = scalar_select 0, %s5, %s3
  $region1: #{tpu_custom_call.1} parent=0
    #allocation2 [shape = 'u8[16384]{0}', space=vmem, size = 0x4000, scoped, tag = 'input window, operand 0']
    #allocation3 [shape = 's32[2]{0}', space=sflag, size = 0x8, scoped, tag = 'scoped memory for tpu_custom_call.1']
    #allocation4 [shape = 's32[2]{0}', space=sflag, size = 0x8, scoped, tag = 'scoped memory for tpu_custom_call.1']
    #allocation5 [shape = 'u8[16384]{0}', space=vmem, size = 0x4000, scoped, tag = 'input window, operand 1']
    #allocation6 [shape = 's32[2]{0}', space=sflag, size = 0x8, scoped, tag = 'scoped memory for tpu_custom_call.1']
    #allocation7 [shape = 'u8[16384]{0}', space=vmem, size = 0x4000, scoped, tag = 'output window, operand 0']
    %7 = vsyncpa [#allocation3], 0
    %s8 = scalar_lea.sflag [#allocation3], 1
    %9 = vsyncpa %s8, 0
    %10 = vsyncpa [#allocation6], 0
    %s11 = scalar_lea.sflag [#allocation6], 1
    %12 = vsyncpa %s11, 0
    %13 = vsyncpa [#allocation4], 0
    %s14 = scalar_lea.sflag [#allocation4], 1
    %15 = vsyncpa %s14, 0
    loop: start=0, step=1, limit=5
    $region2: #{tpu_custom_call.1} parent=1 // loop_pre_header
      _
    $region3: #{tpu_custom_call.1} parent=1 // loop_header
      %s17 = sphi 0, %s21
      %p18 = scmp.ge.s32.totalorder %s17, 5
      %s24 = sphi 0, %s43
      %s25 = sphi 0, %s39
      %s26 = sphi 0, %s35
      %s27 = sphi 0, %s24
      %s28 = sphi 0, %s25
      %s29 = sphi 0, %s26
      %s30 = sphi 0, %s27
      %s31 = sphi 0, %s28
      %s32 = sphi 0, %s29
      %s48 = sphi 0, %s50
      %s51 = sphi 0, %s48
      %s52 = sphi 0, %s51
      %s68 = sphi 0, %s52
      %s76 = sphi 0, %s78
      %s79 = sphi 0, %s76
      %s80 = sphi 0, %s79
      %s96 = sphi 0, %s80
      %s106 = sphi 0, %s108
      %s109 = sphi 0, %s106
      %s110 = sphi 0, %s109
      %s126 = sphi 0, %s110
    $region4: #{tpu_custom_call.1} parent=1 // loop_header_branch
      %20 = sbr.rel (%p18) target = $region8
    $region5: #{tpu_custom_call.1} parent=1 // loop_body
      %s22 = ssub.s32 %s17, 1
      %s23 = ssub.s32 %s17, 2
      %s33 = sadd.s32 1, %s26
      %p34 = scmp.ge.s32.totalorder %s33, 1
      %s35 = scalar_select %p34, 0, %s33
      %s36 = sadd.s32 1, %s25
      %s37 = scalar_select %p34, %s36, %s25
      %p38 = scmp.ge.s32.totalorder %s37, 1
      %s39 = scalar_select %p38, 0, %s37
      %s40 = sadd.s32 1, %s24
      %s41 = scalar_select %p38, %s40, %s24
      %p42 = scmp.ge.s32.totalorder %s41, 3
      %s43 = scalar_select %p42, 0, %s41
      %s44 = ssub.s32 %s24, %s43
      %s45 = ssub.s32 %s25, %s39
      %s46 = sor.u32 %s44, %s45
      %p47 = scmp.eq.s32.totalorder %s46, 0
      %s49 = sadd.s32 %s48, 1
      %s50 = scalar_select %p47, %s48, %s49
      %p53 = pneg %p47
      %p54 = scmp.eq.s32.totalorder %s17, 2
      %p55 = por %p53, %p54
      %p56 = scmp.ne.s32.totalorder %s48, %s51
      %p57 = scmp.eq.s32.totalorder %s17, 0
      %p58 = por %p56, %p57
      %p59 = scmp.ne.s32.totalorder %s48, %s51
      %p60 = scmp.eq.s32.totalorder %s22, 2
      %p61 = por %p59, %p60
      %p62 = scmp.ne.s32.totalorder %s51, %s52
      %p63 = scmp.eq.s32.totalorder %s22, 0
      %p64 = por %p62, %p63
      %p65 = scmp.ne.s32.totalorder %s51, %s52
      %p66 = scmp.eq.s32.totalorder %s23, 2
      %p67 = por %p65, %p66
      %p69 = scmp.ne.s32.totalorder %s52, %s68
      %p70 = scmp.eq.s32.totalorder %s23, 0
      %p71 = por %p69, %p70
      %s72 = ssub.s32 %s24, %s43
      %s73 = ssub.s32 %s26, %s35
      %s74 = sor.u32 %s72, %s73
      %p75 = scmp.eq.s32.totalorder %s74, 0
      %s77 = sadd.s32 %s76, 1
      %s78 = scalar_select %p75, %s76, %s77
      %p81 = pneg %p75
      %p82 = scmp.eq.s32.totalorder %s17, 2
      %p83 = por %p81, %p82
      %p84 = scmp.ne.s32.totalorder %s76, %s79
      %p85 = scmp.eq.s32.totalorder %s17, 0
      %p86 = por %p84, %p85
      %p87 = scmp.ne.s32.totalorder %s76, %s79
      %p88 = scmp.eq.s32.totalorder %s22, 2
      %p89 = por %p87, %p88
      %p90 = scmp.ne.s32.totalorder %s79, %s80
      %p91 = scmp.eq.s32.totalorder %s22, 0
      %p92 = por %p90, %p91
      %p93 = scmp.ne.s32.totalorder %s79, %s80
      %p94 = scmp.eq.s32.totalorder %s23, 2
      %p95 = por %p93, %p94
      %p97 = scmp.ne.s32.totalorder %s80, %s96
      %p98 = scmp.eq.s32.totalorder %s23, 0
      %p99 = por %p97, %p98
      %s100 = ssub.s32 %s24, %s43
      %s101 = ssub.s32 %s25, %s39
      %s102 = sor.u32 %s100, %s101
      %s103 = ssub.s32 %s26, %s35
      %s104 = sor.u32 %s102, %s103
      %p105 = scmp.eq.s32.totalorder %s104, 0
      %s107 = sadd.s32 %s106, 1
      %s108 = scalar_select %p105, %s106, %s107
      %p111 = pneg %p105
      %p112 = scmp.eq.s32.totalorder %s17, 2
      %p113 = por %p111, %p112
      %p114 = scmp.ne.s32.totalorder %s106, %s109
      %p115 = scmp.eq.s32.totalorder %s17, 0
      %p116 = por %p114, %p115
      %p117 = scmp.ne.s32.totalorder %s106, %s109
      %p118 = scmp.eq.s32.totalorder %s22, 2
      %p119 = por %p117, %p118
      %p120 = scmp.ne.s32.totalorder %s109, %s110
      %p121 = scmp.eq.s32.totalorder %s22, 0
      %p122 = por %p120, %p121
      %p123 = scmp.ne.s32.totalorder %s109, %s110
      %p124 = scmp.eq.s32.totalorder %s23, 2
      %p125 = por %p123, %p124
      %p127 = scmp.ne.s32.totalorder %s110, %s126
      %p128 = scmp.eq.s32.totalorder %s23, 0
      %p129 = por %p127, %p128
      %p130 = scmp.le.s32.totalorder 1, %s17
      %p131 = scmp.lt.s32.totalorder %s17, 4
      %p132 = pnand %p130, %p131
      %p133 = pneg %p132
      // Predicated region
      $region9: #{tpu_custom_call.1} parent=5 // pred_check
        _
      $region10: #{tpu_custom_call.1} parent=5 // pred_check_branch
        %135 = sbr.rel (%p132) target = $region12
      $region11: #{tpu_custom_call.1} parent=5 // pred_region
        %s136 = ssub.s32 %s17, 1
      $region12: #{tpu_custom_call.1} parent=5 // pred_fallthru
        _
      %p137 = scmp.lt.s32.totalorder %s17, 3
      // Predicated region
      $region13: #{tpu_custom_call.1} parent=5 // pred_check
        %p138 = pneg %p137
      $region14: #{tpu_custom_call.1} parent=5 // pred_check_branch
        %140 = sbr.rel (%p138) target = $region16
      $region15: #{tpu_custom_call.1} parent=5 // pred_region
        // Predicated region
        $region17: #{tpu_custom_call.1} parent=15 // pred_check
          %p141 = pneg %p58
        $region18: #{tpu_custom_call.1} parent=15 // pred_check_branch
          %143 = sbr.rel (%p141) target = $region20
        $region19: #{tpu_custom_call.1} parent=15 // pred_region
          %s144 = sand.u32 %s48, 1
          %s145 = scalar_lea.sflag [#allocation3], %s144
          %s146 = sand.u32 %s48, 1
          %s147 = smul.addr %s146, 16
          %s148 = scalar_lea.vmem [#allocation2], %s147
          %s149 = smul.u32 2, %s25
          %151 = vsyncadd %s145, 0
          %s152 = smul.addr %s24, 2
          %s153 = sadd.s32 %s149, %s152
          %s154 = smul.addr %s153, 8
          %s155 = scalar_lea.hbm %s0, %s154
          %s156 = sshll.u32 %s155, 4
          %s157 = int_to_ptr.hbm [resolvable:$true] %s156
          %s158 = sshll.u32 %s148, 4
          %s159 = int_to_ptr.vmem [resolvable:$true] %s158
          %164 = dma.hbm_to_vmem [thread:$0]  %s157, 256, %s159, %s145, 128, 128, 8
        $region20: #{tpu_custom_call.1} parent=15 // pred_fallthru
          _
        // Predicated region
        $region21: #{tpu_custom_call.1} parent=15 // pred_check
          %p165 = pneg %p86
        $region22: #{tpu_custom_call.1} parent=15 // pred_check_branch
          %167 = sbr.rel (%p165) target = $region24
        $region23: #{tpu_custom_call.1} parent=15 // pred_region
          %s168 = sand.u32 %s76, 1
          %s169 = scalar_lea.sflag [#allocation6], %s168
          %s170 = sand.u32 %s76, 1
          %s171 = smul.addr %s170, 16
          %s172 = scalar_lea.vmem [#allocation5], %s171
          %s173 = smul.u32 2, %s26
          %175 = vsyncadd %s169, 0
          %s176 = smul.addr %s24, 2
          %s177 = sadd.s32 %s173, %s176
          %s178 = smul.addr %s177, 8
          %s179 = scalar_lea.hbm %s1, %s178
          %s180 = sshll.u32 %s179, 4
          %s181 = int_to_ptr.hbm [resolvable:$true] %s180
          %s182 = sshll.u32 %s172, 4
          %s183 = int_to_ptr.vmem [resolvable:$true] %s182
          %188 = dma.hbm_to_vmem [thread:$0]  %s181, 256, %s183, %s169, 128, 128, 8
        $region24: #{tpu_custom_call.1} parent=15 // pred_fallthru
          _
      $region16: #{tpu_custom_call.1} parent=5 // pred_fallthru
        _
      %p189 = scmp.le.s32.totalorder 1, %s17
      %p190 = scmp.lt.s32.totalorder %s17, 4
      %p191 = pnand %p189, %p190
      %p192 = pneg %p191
      // Predicated region
      $region25: #{tpu_custom_call.1} parent=5 // pred_check
        _
      $region26: #{tpu_custom_call.1} parent=5 // pred_check_branch
        %194 = sbr.rel (%p191) target = $region28
      $region27: #{tpu_custom_call.1} parent=5 // pred_region
        %s195 = ssub.s32 %s17, 1
        %s196 = sand.u32 %s51, 1
        %s197 = scalar_lea.sflag [#allocation3], %s196
        %s198 = sand.u32 %s51, 1
        %s199 = smul.addr %s198, 16
        %s200 = scalar_lea.vmem [#allocation2], %s199
        // Predicated region
        $region29: #{tpu_custom_call.1} parent=27 // pred_check
          %p201 = pneg %p64
        $region30: #{tpu_custom_call.1} parent=27 // pred_check_branch
          %203 = sbr.rel (%p201) target = $region32
        $region31: #{tpu_custom_call.1} parent=27 // pred_region
          %205 = dma.done %s197, 256
        $region32: #{tpu_custom_call.1} parent=27 // pred_fallthru
          _
        %s206 = sand.u32 %s79, 1
        %s207 = scalar_lea.sflag [#allocation6], %s206
        %s208 = sand.u32 %s79, 1
        %s209 = smul.addr %s208, 16
        %s210 = scalar_lea.vmem [#allocation5], %s209
        // Predicated region
        $region33: #{tpu_custom_call.1} parent=27 // pred_check
          %p211 = pneg %p92
        $region34: #{tpu_custom_call.1} parent=27 // pred_check_branch
          %213 = sbr.rel (%p211) target = $region36
        $region35: #{tpu_custom_call.1} parent=27 // pred_region
          %215 = dma.done %s207, 256
        $region36: #{tpu_custom_call.1} parent=27 // pred_fallthru
          _
        %s216 = sand.u32 %s51, 1
        %s217 = scalar_lea.sflag [#allocation3], %s216
        %s218 = sand.u32 %s51, 1
        %s219 = smul.addr %s218, 16
        %s220 = scalar_lea.vmem [#allocation2], %s219
        %p221 = pneg %p64
        %p222 = pneg %p61
        %s223 = sand.u32 %s79, 1
        %s224 = scalar_lea.sflag [#allocation6], %s223
        %s225 = sand.u32 %s79, 1
        %s226 = smul.addr %s225, 16
        %s227 = scalar_lea.vmem [#allocation5], %s226
        %p228 = pneg %p92
        %p229 = pneg %p89
        %p230 = pneg %p122
        %p231 = pneg %p119
        %s232 = sand.u32 %s109, 1
        %s233 = scalar_lea.sflag [#allocation4], %s232
        %s234 = sand.u32 %s109, 1
        %s235 = smul.addr %s234, 16
        %s236 = scalar_lea.vmem [#allocation7], %s235
        %s237 = smul.u32 2, %s28
        %s238 = smul.u32 2, %s29
        %s239 = smul.u32 2, %s28
        %v240 = vld [vmem:[%s200] sm:$0xff]
        %v241 = vld [vmem:[%s200 + $0x8] sm:$0xff]
        %v242 = vld [vmem:[%s210] sm:$0xff]
        %v243 = vld [vmem:[%s210 + $0x8] sm:$0xff]
        %vm244 = vcmask 261120
        %v246 = vsel %vm244, %v240, 0
        %v249 = vsel %vm244, %v241, 0
        %v252 = vsel %vm244, %v242, 0
        %v255 = vsel %vm244, %v243, 0
        %257 = vmatpush.xpose.msra.mxu0 0.0
        %258 = vmatpush.xpose.msra.mxu0 0.0
        %259 = vmatpush.xpose.msra.mxu0 0.0
        %260 = vmatpush.xpose.msra.mxu0 0.0
        %261 = vmatpush.xpose.msra.mxu0 0.0
        %262 = vmatpush.xpose.msra.mxu0 0.0
        %263 = vmatpush.xpose.msra.mxu0 0.0
        %264 = vmatpush.xpose.msra.mxu0 0.0
        %265 = vmatpush.xpose.msra.mxu0 0.0
        %266 = vmatpush.xpose.msra.mxu0 0.0
        %267 = vmatpush.xpose.msra.mxu0 0.0
        %268 = vmatpush.xpose.msra.mxu0 0.0
        %269 = vmatpush.xpose.msra.mxu0 0.0
        %270 = vmatpush.xpose.msra.mxu0 0.0
        %271 = vmatpush.xpose.msra.mxu0 %v255
        %272 = vmatpush.xpose.msra.mxu0 %v252
        %273 = vmatmul.f32.gmra.mxu0 %v246
        %v274 = vpop.f32.mrf.mxu0
        %v275 = vadd.f32 0.0, %v274
        %276 = vmatmul.f32.gmra.mxu0 %v249
        %v277 = vpop.f32.mrf.mxu0
        %v278 = vadd.f32 0.0, %v277
        %279 = vdwg.mxu0
        %v280 = vmul.f32 %v275, 0.5
        %v281 = vmul.f32 %v278, 0.5
        %v282 = vtanh.pop %v280
        %v283 = vtanh.pop %v281
        %v284 = vmul.f32 %v282, 0.5
        %v285 = vmul.f32 %v283, 0.5
        %v286 = vadd.f32 %v284, 0.5
        %v287 = vadd.f32 %v285, 0.5
        %vm288 = vcmask 130048
        %289 = vst.msk [vmem:[%s236] sm:$0xff] %vm288, %v286
        %290 = vst.msk [vmem:[%s236 + $0x8] sm:$0xff] %vm288, %v287
        %s291 = sand.u32 %s109, 1
        %s292 = scalar_lea.sflag [#allocation4], %s291
        %s293 = sand.u32 %s109, 1
        %s294 = smul.addr %s293, 16
        %s295 = scalar_lea.vmem [#allocation7], %s294
        // Predicated region
        $region37: #{tpu_custom_call.1} parent=27 // pred_check
          %p296 = pneg %p119
        $region38: #{tpu_custom_call.1} parent=27 // pred_check_branch
          %298 = sbr.rel (%p296) target = $region40
        $region39: #{tpu_custom_call.1} parent=27 // pred_region
          %s299 = smul.u32 2, %s28
          %301 = vsyncadd %s292, 0
          %s302 = sadd.s32 %s29, %s299
          %s303 = smul.addr %s27, 2
          %s304 = sadd.s32 %s302, %s303
          %s305 = smul.addr %s304, 8
          %s306 = scalar_lea.hbm %s2, %s305
          %s307 = sshll.u32 %s295, 4
          %s308 = int_to_ptr.vmem [resolvable:$true] %s307
          %s309 = sshll.u32 %s306, 4
          %s310 = int_to_ptr.hbm [resolvable:$true] %s309
          %315 = dma.vmem_to_hbm [thread:$0]  %s308, 256, %s310, %s292, 128, 128, 8
        $region40: #{tpu_custom_call.1} parent=27 // pred_fallthru
          _
      $region28: #{tpu_custom_call.1} parent=5 // pred_fallthru
        _
      %p316 = scmp.le.s32.totalorder 2, %s17
      // Predicated region
      $region41: #{tpu_custom_call.1} parent=5 // pred_check
        %p317 = pneg %p316
      $region42: #{tpu_custom_call.1} parent=5 // pred_check_branch
        %319 = sbr.rel (%p317) target = $region44
      $region43: #{tpu_custom_call.1} parent=5 // pred_region
        %s320 = ssub.s32 %s17, 2
        // Predicated region
        $region45: #{tpu_custom_call.1} parent=43 // pred_check
          %p321 = pneg %p125
        $region46: #{tpu_custom_call.1} parent=43 // pred_check_branch
          %323 = sbr.rel (%p321) target = $region48
        $region47: #{tpu_custom_call.1} parent=43 // pred_region
          %s324 = sand.u32 %s110, 1
          %s325 = scalar_lea.sflag [#allocation4], %s324
          %s326 = sand.u32 %s110, 1
          %s327 = smul.addr %s326, 16
          %s328 = scalar_lea.vmem [#allocation7], %s327
          %330 = dma.done %s325, 256
        $region48: #{tpu_custom_call.1} parent=43 // pred_fallthru
          _
      $region44: #{tpu_custom_call.1} parent=5 // pred_fallthru
        _
    $region6: #{tpu_custom_call.1} parent=1 // loop_footer
      %s21 = sadd.s32 1, %s17
    $region7: #{tpu_custom_call.1} parent=1 // loop_footer_branch
      %16 = sbr.rel target = $region3
    $region8: #{tpu_custom_call.1} parent=1 // loop_exit
      _
    %331 = vsyncpa [#allocation3], 1
    %s332 = scalar_lea.sflag [#allocation3], 1
    %333 = vsyncpa %s332, 1
    %334 = vsyncpa [#allocation6], 1
    %s335 = scalar_lea.sflag [#allocation6], 1
    %336 = vsyncpa %s335, 1
    %337 = vsyncpa [#allocation4], 1
    %s338 = scalar_lea.sflag [#allocation4], 1
    %339 = vsyncpa %s338, 1

</llo_original>
